<compile_context>
chip_gen: v6e
topology: v6e:2x2x1
jax: 0.10.0
libtpu: 0.0.40
codegen_flags: <defaults>
</compile_context>

<pallas_src>
import functools

import jax
import jax.numpy as jnp
from jax.experimental import pallas as pl
from jax.experimental.pallas import tpu as pltpu

_MiB = 1024 * 1024


# --------------------------------------------------------------------------- #
# Kernel
# --------------------------------------------------------------------------- #
def _linear_bias_kernel(x_ref, w_ref, b_ref, o_ref, *, tn):
    """One (tm, tn) output tile; full-K contraction in a single MXU pass.

    x_ref: [tm, K]      activations
    w_ref: [K,  tn]     pre-transposed weight column block (natural MXU layout)
    b_ref: [1,  N_pad]  full bias row, resident in VMEM across all grid steps
    o_ref: [tm, tn]     output tile
    """
    acc = jnp.dot(x_ref[...], w_ref[...], preferred_element_type=jnp.float32)
    off = pl.program_id(1) * tn
    if tn % 128 == 0:                       # static; tn is either N or 128-multiple
        off = pl.multiple_of(off, 128)      # aligned lane slice of the resident bias
    bias = b_ref[:, pl.ds(off, tn)].astype(jnp.float32)
    o_ref[...] = (acc + bias).astype(o_ref.dtype)


# --------------------------------------------------------------------------- #
# Tiling / VMEM policy
# --------------------------------------------------------------------------- #
def _vmem_policy():
    """Per-generation (budget_for_tiling, vmem_limit_cap) in bytes."""
    try:
        cap = int(pltpu.get_tpu_info().vmem_capacity_bytes)
    except Exception:  # pragma: no cover - conservative fallback (v7x-sized)
        cap = 64 * _MiB
    budget = int(0.6 * cap)                     # v5e/v6e ~76 MiB, v7x ~38 MiB
    limit_cap = max(32 * _MiB, cap - 16 * _MiB)  # v5e/v6e 112 MiB, v7x 48 MiB
    return budget, limit_cap


def _tile_vmem_bytes(tm, tn, K, n_pad, act_itemsize, w_itemsize, w_buffers=2):
    """VMEM footprint of one pipelined working set (uses real per-operand dtypes)."""
    x_b = 2 * tm * K * act_itemsize            # double-buffered activations
    w_b = w_buffers * K * tn * w_itemsize      # weight stream (2- or 3-deep)
    b_b = 2 * n_pad * w_itemsize               # resident bias (counted conservatively)
    o_b = 2 * tm * tn * act_itemsize           # double-buffered output tile
    return x_b + w_b + b_b + o_b


def _pick_tiles(M, K, N, act_itemsize, w_itemsize, vmem_budget):
    """Choose (tm, tn) for a full-K, weight-streaming matmul."""
    # Keep the whole activation resident when M is small (typical projector).
    tm = M if M <= 1024 else 1024

    def fits(tm_, tn_):
        n_pad = pl.cdiv(N, tn_) * tn_
        return _tile_vmem_bytes(tm_, tn_, K, n_pad,
                                act_itemsize, w_itemsize) <= vmem_budget

    if N <= 128:
        tn = N
    else:
        # Largest lane-dense tile: multiple of 128, capped at 1024.
        tn = min(1024, (N // 128) * 128)
        while tn > 128 and not fits(tm, tn):
            tn -= 128
        # Prefer an EVEN number of N tiles so v7x's two TensorCores (and
        # megacore sharding generally) split the weight stream evenly, and so
        # there are >= 2 parallel grid blocks whenever N allows it.
        n_tiles = pl.cdiv(N, tn)
        if n_tiles % 2 == 1 and N >= 256:
            tn_even = ((pl.cdiv(N, n_tiles + 1) + 127) // 128) * 128
            if tn_even >= 128 and pl.cdiv(N, tn_even) % 2 == 0:
                tn = tn_even

    # Last resort: shrink tm until the working set fits.
    while not fits(tm, tn) and tm > 8:
        tm = max(8, ((tm // 2) // 8) * 8)
    return tm, tn


# --------------------------------------------------------------------------- #
# pallas_call wrapper
# --------------------------------------------------------------------------- #
@functools.partial(
    jax.jit, static_argnames=("tm", "tn", "vmem_limit", "w_buffers"))
def _projector_matmul(x2d, weight_t, bias2d, *, tm, tn, vmem_limit, w_buffers):
    """x2d: [M, K], weight_t: [K, N] (pre-transposed), bias2d: [1, N] -> [M, N]."""
    M, K = x2d.shape
    N = weight_t.shape[1]
    grid = (pl.cdiv(M, tm), pl.cdiv(N, tn))

    # Pad the (tiny) bias row so the in-kernel pl.ds slice is always in-bounds,
    # even on the last (partial) N tile.
    n_pad = grid[1] * tn
    if n_pad != N:
        bias2d = jnp.pad(bias2d, ((0, 0), (0, n_pad - N)))

    w_spec_kwargs = {}
    if w_buffers > 2:
        # Deeper weight pipelining hides the first-tile DMA ramp on short
        # weight streams (mainly v7x); only used when VMEM comfortably allows.
        w_spec_kwargs["pipeline_mode"] = pl.Buffered(w_buffers)

    return pl.pallas_call(
        functools.partial(_linear_bias_kernel, tn=tn),
        out_shape=jax.ShapeDtypeStruct((M, N), x2d.dtype),
        grid_spec=pltpu.PrefetchScalarGridSpec(
            num_scalar_prefetch=0,
            grid=grid,
            in_specs=[
                pl.BlockSpec((tm, K), lambda i, j: (i, 0)),        # activations
                pl.BlockSpec((K, tn), lambda i, j: (0, j),         # weight cols
                             **w_spec_kwargs),
                pl.BlockSpec((1, n_pad), lambda i, j: (0, 0)),     # resident bias
            ],
            out_specs=pl.BlockSpec((tm, tn), lambda i, j: (i, j)),
        ),
        compiler_params=pltpu.CompilerParams(
            dimension_semantics=("parallel", "parallel"),
            vmem_limit_bytes=vmem_limit,
        ),
    )(x2d, weight_t, bias2d)


# --------------------------------------------------------------------------- #
# Public API
# --------------------------------------------------------------------------- #
def prepare_projector_params(weight, bias):
    """One-time parameter prep (do this at load time, not per forward call).

    weight: [hidden_size, d_model]  PyTorch nn.Linear layout
    bias:   [hidden_size]
    returns (weight_t [d_model, hidden_size], bias2d [1, hidden_size])

    Transposing once here lets the kernel use the natural MXU contraction
    (lhs last dim x rhs first dim) with no per-tile relayout of the streamed
    weight. To halve HBM traffic further, cast these to bf16 here if the model
    numerics allow (accumulation stays in f32 inside the kernel).
    """
    weight_t = jnp.asarray(weight).T
    bias2d = jnp.asarray(bias).reshape(1, -1)
    return weight_t, bias2d


def aero_audio_multimodal_projector(audio_features, weight_t, bias2d):
    """JAX/Pallas equivalent of AeroAudioMultiModalProjector.forward.

    audio_features: [B, S, d_model]
    weight_t:       [d_model, hidden_size]  (pre-transposed, see prepare_projector_params)
    bias2d:         [1, hidden_size]
    returns:        [B, S, hidden_size]
    """
    B, S, K = audio_features.shape
    assert weight_t.shape[0] == K, "weight must be pre-transposed to [d_model, hidden]"
    N = weight_t.shape[1]
    M = B * S

    act_is = jnp.dtype(audio_features.dtype).itemsize
    w_is = jnp.dtype(weight_t.dtype).itemsize

    budget, limit_cap = _vmem_policy()
    tm, tn = _pick_tiles(M, K, N, act_is, w_is, budget)

    n_pad = pl.cdiv(N, tn) * tn
    n_steps = pl.cdiv(M, tm) * pl.cdiv(N, tn)
    # 3-deep weight buffering only when there are >= ~3 steps per TensorCore
    # and the deeper working set still fits the per-generation budget.
    needed3 = _tile_vmem_bytes(tm, tn, K, n_pad, act_is, w_is, w_buffers=3)
    w_buffers = 3 if (n_steps >= 6 and needed3 <= budget) else 2

    needed = _tile_vmem_bytes(tm, tn, K, n_pad, act_is, w_is, w_buffers=w_buffers)
    vmem_limit = int(min(max(needed + 8 * _MiB, 32 * _MiB), limit_cap))

    x2d = audio_features.reshape(M, K)
    out2d = _projector_matmul(x2d, weight_t, bias2d,
                              tm=tm, tn=tn, vmem_limit=vmem_limit,
                              w_buffers=w_buffers)
    return out2d.reshape(B, S, N)


# --------------------------------------------------------------------------- #
# Self-test
# --------------------------------------------------------------------------- #
if __name__ == "__main__":
    # Small synthetic config: d_model=128 (audio), hidden_size=256 (text).
    B, S, D_MODEL, HIDDEN = 2, 8, 128, 256

    key = jax.random.PRNGKey(0)
    k_x, k_w, k_b = jax.random.split(key, 3)

    audio_features = jax.random.normal(k_x, (B, S, D_MODEL), dtype=jnp.float32)
    # nn.Linear(d_model, hidden): W in PyTorch [N, K] layout, b [N].
    bound = 1.0 / (D_MODEL ** 0.5)
    weight = jax.random.uniform(
        k_w, (HIDDEN, D_MODEL), minval=-bound, maxval=bound, dtype=jnp.float32)
    bias = jax.random.uniform(
        k_b, (HIDDEN,), minval=-bound, maxval=bound, dtype=jnp.float32)

    # One-time parameter prep (transpose weight to [K, N]).
    weight_t, bias2d = prepare_projector_params(weight, bias)

    out = aero_audio_multimodal_projector(audio_features, weight_t, bias2d)
    out = jax.block_until_ready(out)

    # Correctness vs. plain-JAX reference of x @ W^T + b.
    ref = jnp.einsum("bsd,nd->bsn", audio_features, weight) + bias
    assert out.shape == (B, S, HIDDEN), out.shape
    assert jnp.allclose(out, ref, atol=1e-5, rtol=1e-5), float(
        jnp.max(jnp.abs(out - ref)))

    # bf16 storage path (review item: halve the dominant HBM stream); looser
    # tolerance because the inputs/weights are rounded to bf16, accumulation
    # is still f32 inside the kernel.
    out_bf16 = aero_audio_multimodal_projector(
        audio_features.astype(jnp.bfloat16),
        weight_t.astype(jnp.bfloat16),
        bias2d.astype(jnp.bfloat16))
    out_bf16 = jax.block_until_ready(out_bf16)
    assert out_bf16.shape == (B, S, HIDDEN)
    assert jnp.allclose(out_bf16.astype(jnp.float32), ref, atol=1e-1, rtol=1e-1)

    print("KERNEL_OK")
</pallas_src>

<mosaic_0001>
module attributes {stable_mosaic.version = 11 : i64} {
  func.func @_linear_bias_kernel(%arg0: i32, %arg1: i32, %arg2: memref<16x128xf32, #tpu.memory_space<vmem>>, %arg3: memref<128x128xf32, #tpu.memory_space<vmem>>, %arg4: memref<1x256xf32, #tpu.memory_space<vmem>>, %arg5: memref<16x128xf32, #tpu.memory_space<vmem>>) attributes {dimension_semantics = [#tpu.dimension_semantics<parallel>, #tpu.dimension_semantics<parallel>], iteration_bounds = array<i64: 1, 2>, scalar_prefetch = 0 : i64, scratch_operands = 0 : i64, tpu.core_type = #tpu.core_type<tc>, window_params = [{transform_indices = @transform_0, window_bounds = array<i64: 16, 128>}, {transform_indices = @transform_1, window_bounds = array<i64: 128, 128>}, {pipeline_mode = #tpu.pipeline_mode<synchronous>, transform_indices = @transform_2, window_bounds = array<i64: 1, 256>}, {transform_indices = @transform_3, window_bounds = array<i64: 16, 128>}]} {
    %c0 = arith.constant 0 : index
    %c0_0 = arith.constant 0 : index
    %0 = vector.load %arg2[%c0, %c0_0] : memref<16x128xf32, #tpu.memory_space<vmem>>, vector<16x128xf32>
    %c0_1 = arith.constant 0 : index
    %c0_2 = arith.constant 0 : index
    %1 = vector.load %arg3[%c0_1, %c0_2] : memref<128x128xf32, #tpu.memory_space<vmem>>, vector<128x128xf32>
    %cst = arith.constant dense<0.000000e+00> : vector<16x128xf32>
    %2 = tpu.matmul %0, %1, %cst {dimension_numbers = #tpu.dot_dimension_numbers<[1], [0], [0], [1], [0, 0, 1, 1], [], []>} : vector<16x128xf32>, vector<128x128xf32>, vector<16x128xf32> -> vector<16x128xf32>
    %c128_i32 = arith.constant 128 : i32
    %3 = arith.muli %arg1, %c128_i32 : i32
    %4 = tpu.assume_multiple %3, 128 : i32
    %c0_3 = arith.constant 0 : index
    %5 = arith.index_cast %4 : i32 to index
    %6 = vector.load %arg4[%c0_3, %5] : memref<1x256xf32, #tpu.memory_space<vmem>>, vector<1x128xf32>
    %7 = vector.broadcast %6 : vector<1x128xf32> to vector<16x128xf32>
    %8 = arith.addf %2, %7 : vector<16x128xf32>
    %c0_4 = arith.constant 0 : index
    %c0_5 = arith.constant 0 : index
    %9 = vector.load %arg5[%c0_4, %c0_5] : memref<16x128xf32, #tpu.memory_space<vmem>>, vector<16x128xf32>
    tpu.vector_store %arg5[%c0_4, %c0_5], %8 {strides = array<i32>} : memref<16x128xf32, #tpu.memory_space<vmem>>, vector<16x128xf32>,
    return
  }
  func.func @transform_0(%arg0: i32, %arg1: i32) -> (i32, i32) {
    %c0_i32 = arith.constant 0 : i32
    %c0_i32_0 = arith.constant 0 : i32
    return %arg0, %c0_i32 : i32, i32
  }
  func.func @transform_1(%arg0: i32, %arg1: i32) -> (i32, i32) {
    %c0_i32 = arith.constant 0 : i32
    %c0_i32_0 = arith.constant 0 : i32
    return %c0_i32, %arg1 : i32, i32
  }
  func.func @transform_2(%arg0: i32, %arg1: i32) -> (i32, i32) {
    %c0_i32 = arith.constant 0 : i32
    %c0_i32_0 = arith.constant 0 : i32
    %c0_i32_1 = arith.constant 0 : i32
    return %c0_i32, %c0_i32_0 : i32, i32
  }
  func.func @transform_3(%arg0: i32, %arg1: i32) -> (i32, i32) {
    %c0_i32 = arith.constant 0 : i32
    return %arg0, %arg1 : i32, i32
  }
}

</mosaic_0001>

<llo_original>
// kernel: _projector_matmul.1
$region0: #{_projector_matmul.1}
  #allocation0 [shape = 'u32[]', space=smem, size = 0x4, offset = 0x4, fixed_abs, tag = 'smem constant byte address 0x4 - core index']
  #allocation1 [shape = 'u32[144,128]{1,0:T(1,128)}', space=vmem, size = 0x12000, scoped, tag = 'internal scratch']
  %s0 = inlined_call_operand.hbm [shape: f32[16,128], index: 0, kind: input, shape index: {}]
  %s1 = inlined_call_operand.hbm [shape: f32[128,256], index: 1, kind: input, shape index: {}]
  %s2 = inlined_call_operand.vmem [shape: f32[1,256], index: 2, kind: input, shape index: {}]
  %s3 = inlined_call_operand.hbm [shape: f32[16,256], index: 3, kind: output, shape index: {}]
  %s4 = sld [smem:[#allocation0]]
  $region53: #{_projector_matmul.1} parent=0
    _
  %s6 = ssub.s32 1, %s4
  %s7 = scalar_select 0, %s6, %s4
  $region1: #{_projector_matmul.1} parent=0
    #allocation2 [shape = 'u8[8192]{0}', space=vmem, size = 0x2000, scoped, tag = 'input window, operand 0, single buffered']
    #allocation3 [shape = 's32[2]{0}', space=sflag, size = 0x8, scoped, tag = 'scoped memory for _projector_matmul.1']
    #allocation4 [shape = 's32[2]{0}', space=sflag, size = 0x8, scoped, tag = 'scoped memory for _projector_matmul.1']
    #allocation5 [shape = 'u8[131072]{0}', space=vmem, size = 0x20000, scoped, tag = 'input window, operand 1']
    #allocation6 [shape = 's32[2]{0}', space=sflag, size = 0x8, scoped, tag = 'scoped memory for _projector_matmul.1']
    #allocation7 [shape = 'u8[16384]{0}', space=vmem, size = 0x4000, scoped, tag = 'output window, operand 0']
    %8 = vsyncpa [#allocation3], 0
    %9 = vsyncpa [#allocation6], 0
    %s10 = scalar_lea.sflag [#allocation6], 1
    %11 = vsyncpa %s10, 0
    %12 = vsyncpa [#allocation4], 0
    %s13 = scalar_lea.sflag [#allocation4], 1
    %14 = vsyncpa %s13, 0
    loop: start=0, step=1, limit=4
    $region2: #{_projector_matmul.1} parent=1 // loop_pre_header
      _
    $region3: #{_projector_matmul.1} parent=1 // loop_header
      %s16 = sphi 0, %s20
      %p17 = scmp.ge.s32.totalorder %s16, 4
      %s23 = sphi 0, %s35
      %s24 = sphi 0, %s31
      %s25 = sphi 0, %s23
      %s26 = sphi 0, %s24
      %s27 = sphi 0, %s25
      %s28 = sphi 0, %s26
      %s38 = sphi 0, %s40
      %s41 = sphi 0, %s38
      %s42 = sphi 0, %s41
      %s58 = sphi 0, %s42
      %s64 = sphi 0, %s66
      %s67 = sphi 0, %s64
      %s68 = sphi 0, %s67
      %s84 = sphi 0, %s68
      %s88 = sphi 0, %s88
      %s90 = sphi 0, %s88
      %s91 = sphi 0, %s90
      %s105 = sphi 0, %s91
      %s113 = sphi 0, %s115
      %s116 = sphi 0, %s113
      %s117 = sphi 0, %s116
      %s133 = sphi 0, %s117
    $region4: #{_projector_matmul.1} parent=1 // loop_header_branch
      %19 = sbr.rel (%p17) target = $region8
    $region5: #{_projector_matmul.1} parent=1 // loop_body
      %s21 = ssub.s32 %s16, 1
      %s22 = ssub.s32 %s16, 2
      %s29 = sadd.s32 1, %s24
      %p30 = scmp.ge.s32.totalorder %s29, 2
      %s31 = scalar_select %p30, 0, %s29
      %s32 = sadd.s32 1, %s23
      %s33 = scalar_select %p30, %s32, %s23
      %p34 = scmp.ge.s32.totalorder %s33, 1
      %s35 = scalar_select %p34, 0, %s33
      %s36 = ssub.s32 %s23, %s35
      %p37 = scmp.eq.s32.totalorder %s36, 0
      %s39 = sadd.s32 %s38, 1
      %s40 = scalar_select %p37, %s38, %s39
      %p43 = pneg %p37
      %p44 = scmp.eq.s32.totalorder %s16, 1
      %p45 = por %p43, %p44
      %p46 = scmp.ne.s32.totalorder %s38, %s41
      %p47 = scmp.eq.s32.totalorder %s16, 0
      %p48 = por %p46, %p47
      %p49 = scmp.ne.s32.totalorder %s38, %s41
      %p50 = scmp.eq.s32.totalorder %s21, 1
      %p51 = por %p49, %p50
      %p52 = scmp.ne.s32.totalorder %s41, %s42
      %p53 = scmp.eq.s32.totalorder %s21, 0
      %p54 = por %p52, %p53
      %p55 = scmp.ne.s32.totalorder %s41, %s42
      %p56 = scmp.eq.s32.totalorder %s22, 1
      %p57 = por %p55, %p56
      %p59 = scmp.ne.s32.totalorder %s42, %s58
      %p60 = scmp.eq.s32.totalorder %s22, 0
      %p61 = por %p59, %p60
      %s62 = ssub.s32 %s24, %s31
      %p63 = scmp.eq.s32.totalorder %s62, 0
      %s65 = sadd.s32 %s64, 1
      %s66 = scalar_select %p63, %s64, %s65
      %p69 = pneg %p63
      %p70 = scmp.eq.s32.totalorder %s16, 1
      %p71 = por %p69, %p70
      %p72 = scmp.ne.s32.totalorder %s64, %s67
      %p73 = scmp.eq.s32.totalorder %s16, 0
      %p74 = por %p72, %p73
      %p75 = scmp.ne.s32.totalorder %s64, %s67
      %p76 = scmp.eq.s32.totalorder %s21, 1
      %p77 = por %p75, %p76
      %p78 = scmp.ne.s32.totalorder %s67, %s68
      %p79 = scmp.eq.s32.totalorder %s21, 0
      %p80 = por %p78, %p79
      %p81 = scmp.ne.s32.totalorder %s67, %s68
      %p82 = scmp.eq.s32.totalorder %s22, 1
      %p83 = por %p81, %p82
      %p85 = scmp.ne.s32.totalorder %s68, %s84
      %p86 = scmp.eq.s32.totalorder %s22, 0
      %p87 = por %p85, %p86
      %s89 = sadd.s32 %s88, 1
      %p92 = scmp.eq.s32.totalorder %s16, 1
      %p93 = scmp.ne.s32.totalorder %s88, %s90
      %p94 = scmp.eq.s32.totalorder %s16, 0
      %p95 = por %p93, %p94
      %p96 = scmp.ne.s32.totalorder %s88, %s90
      %p97 = scmp.eq.s32.totalorder %s21, 1
      %p98 = por %p96, %p97
      %p99 = scmp.ne.s32.totalorder %s90, %s91
      %p100 = scmp.eq.s32.totalorder %s21, 0
      %p101 = por %p99, %p100
      %p102 = scmp.ne.s32.totalorder %s90, %s91
      %p103 = scmp.eq.s32.totalorder %s22, 1
      %p104 = por %p102, %p103
      %p106 = scmp.ne.s32.totalorder %s91, %s105
      %p107 = scmp.eq.s32.totalorder %s22, 0
      %p108 = por %p106, %p107
      %s109 = ssub.s32 %s23, %s35
      %s110 = ssub.s32 %s24, %s31
      %s111 = sor.u32 %s109, %s110
      %p112 = scmp.eq.s32.totalorder %s111, 0
      %s114 = sadd.s32 %s113, 1
      %s115 = scalar_select %p112, %s113, %s114
      %p118 = pneg %p112
      %p119 = scmp.eq.s32.totalorder %s16, 1
      %p120 = por %p118, %p119
      %p121 = scmp.ne.s32.totalorder %s113, %s116
      %p122 = scmp.eq.s32.totalorder %s16, 0
      %p123 = por %p121, %p122
      %p124 = scmp.ne.s32.totalorder %s113, %s116
      %p125 = scmp.eq.s32.totalorder %s21, 1
      %p126 = por %p124, %p125
      %p127 = scmp.ne.s32.totalorder %s116, %s117
      %p128 = scmp.eq.s32.totalorder %s21, 0
      %p129 = por %p127, %p128
      %p130 = scmp.ne.s32.totalorder %s116, %s117
      %p131 = scmp.eq.s32.totalorder %s22, 1
      %p132 = por %p130, %p131
      %p134 = scmp.ne.s32.totalorder %s117, %s133
      %p135 = scmp.eq.s32.totalorder %s22, 0
      %p136 = por %p134, %p135
      %p137 = scmp.le.s32.totalorder 1, %s16
      %p138 = scmp.lt.s32.totalorder %s16, 3
      %p139 = pnand %p137, %p138
      %p140 = pneg %p139
      // Predicated region
      $region9: #{_projector_matmul.1} parent=5 // pred_check
        _
      $region10: #{_projector_matmul.1} parent=5 // pred_check_branch
        %142 = sbr.rel (%p139) target = $region12
      $region11: #{_projector_matmul.1} parent=5 // pred_region
        %s143 = ssub.s32 %s16, 1
        // Predicated region
        $region13: #{_projector_matmul.1} parent=11 // pred_check
          %p144 = pneg %p54
        $region14: #{_projector_matmul.1} parent=11 // pred_check_branch
          %146 = sbr.rel (%p144) target = $region16
        $region15: #{_projector_matmul.1} parent=11 // pred_region
          %s147 = smul.u32 2, %s25
          %s149 = ssub.s32 256, 256
          %150 = vsyncadd [#allocation3], %s149
          %s151 = smul.addr %s147, 128
          %s152 = scalar_lea.hbm %s0, %s151
          %s153 = sshll.u32 [#allocation2], 4
          %s154 = int_to_ptr.vmem [resolvable:$true] %s153
          %159 = dma.hbm_to_vmem [thread:$0]  %s152, 256, %s154, [#allocation3], 128, 128, 8
        $region16: #{_projector_matmul.1} parent=11 // pred_fallthru
          _
        // Predicated region
        $region17: #{_projector_matmul.1} parent=11 // pred_check
          %p160 = pneg %p101
        $region18: #{_projector_matmul.1} parent=11 // pred_check_branch
          %162 = sbr.rel (%p160) target = $region20
        $region19: #{_projector_matmul.1} parent=11 // pred_region
          _
        $region20: #{_projector_matmul.1} parent=11 // pred_fallthru
          _
      $region12: #{_projector_matmul.1} parent=5 // pred_fallthru
        _
      %p163 = scmp.lt.s32.totalorder %s16, 2
      // Predicated region
      $region21: #{_projector_matmul.1} parent=5 // pred_check
        %p164 = pneg %p163
      $region22: #{_projector_matmul.1} parent=5 // pred_check_branch
        %166 = sbr.rel (%p164) target = $region24
      $region23: #{_projector_matmul.1} parent=5 // pred_region
        // Predicated region
        $region25: #{_projector_matmul.1} parent=23 // pred_check
          %p167 = pneg %p74
        $region26: #{_projector_matmul.1} parent=23 // pred_check_branch
          %169 = sbr.rel (%p167) target = $region28
        $region27: #{_projector_matmul.1} parent=23 // pred_region
          %s170 = sand.u32 %s64, 1
          %s171 = scalar_lea.sflag [#allocation6], %s170
          %s172 = sand.u32 %s64, 1
          %s173 = smul.addr %s172, 128
          %s174 = scalar_lea.vmem [#allocation5], %s173
          %s176 = ssub.s32 2048, 2048
          %177 = vsyncadd %s171, %s176
          %s178 = smul.addr %s24, 128
          %s179 = scalar_lea.hbm %s1, %s178
          %s180 = sshll.u32 %s174, 4
          %s181 = int_to_ptr.vmem [resolvable:$true] %s180
          %186 = dma.hbm_to_vmem [thread:$0]  %s179, 2048, %s181, %s171, 256, 128, 8
        $region28: #{_projector_matmul.1} parent=23 // pred_fallthru
          _
      $region24: #{_projector_matmul.1} parent=5 // pred_fallthru
        _
      %p187 = scmp.le.s32.totalorder 1, %s16
      %p188 = scmp.lt.s32.totalorder %s16, 3
      %p189 = pnand %p187, %p188
      %p190 = pneg %p189
      // Predicated region
      $region29: #{_projector_matmul.1} parent=5 // pred_check
        _
      $region30: #{_projector_matmul.1} parent=5 // pred_check_branch
        %192 = sbr.rel (%p189) target = $region32
      $region31: #{_projector_matmul.1} parent=5 // pred_region
        %s193 = ssub.s32 %s16, 1
        // Predicated region
        $region33: #{_projector_matmul.1} parent=31 // pred_check
          %p194 = pneg %p54
        $region34: #{_projector_matmul.1} parent=31 // pred_check_branch
          %196 = sbr.rel (%p194) target = $region36
        $region35: #{_projector_matmul.1} parent=31 // pred_region
          %197 = dma.done [#allocation3], 256
        $region36: #{_projector_matmul.1} parent=31 // pred_fallthru
          _
        %s198 = sand.u32 %s67, 1
        %s199 = scalar_lea.sflag [#allocation6], %s198
        %s200 = sand.u32 %s67, 1
        %s201 = smul.addr %s200, 128
        %s202 = scalar_lea.vmem [#allocation5], %s201
        // Predicated region
        $region37: #{_projector_matmul.1} parent=31 // pred_check
          %p203 = pneg %p80
        $region38: #{_projector_matmul.1} parent=31 // pred_check_branch
          %205 = sbr.rel (%p203) target = $region40
        $region39: #{_projector_matmul.1} parent=31 // pred_region
          %206 = dma.done %s199, 2048
        $region40: #{_projector_matmul.1} parent=31 // pred_fallthru
          _
        %p207 = pneg %p54
        %p208 = pneg %p51
        %s209 = sand.u32 %s67, 1
        %s210 = scalar_lea.sflag [#allocation6], %s209
        %s211 = sand.u32 %s67, 1
        %s212 = smul.addr %s211, 128
        %s213 = scalar_lea.vmem [#allocation5], %s212
        %p214 = pneg %p80
        %p215 = pneg %p77
        %p216 = pneg %p101
        %p217 = pneg %p98
        %p218 = pneg %p129
        %p219 = pneg %p126
        %s220 = sand.u32 %s116, 1
        %s221 = scalar_lea.sflag [#allocation4], %s220
        %s222 = sand.u32 %s116, 1
        %s223 = smul.addr %s222, 16
        %s224 = scalar_lea.vmem [#allocation7], %s223
        %s225 = smul.u32 2, %s25
        %s226 = smul.u32 2, %s25
        %v227 = vld [vmem:[#allocation2] sm:$0xff]
        %v228 = vld [vmem:[#allocation2 + $0x8] sm:$0xff]
        %v229 = vld [vmem:[%s202] sm:$0xff]
        %v230 = vld [vmem:[%s202 + $0x8] sm:$0xff]
        %v231 = vld [vmem:[%s202 + $0x10] sm:$0xff]
        %v232 = vld [vmem:[%s202 + $0x18] sm:$0xff]
        %v233 = vld [vmem:[%s202 + $0x20] sm:$0xff]
        %v234 = vld [vmem:[%s202 + $0x28] sm:$0xff]
        %v235 = vld [vmem:[%s202 + $0x30] sm:$0xff]
        %v236 = vld [vmem:[%s202 + $0x38] sm:$0xff]
        %v237 = vld [vmem:[%s202 + $0x40] sm:$0xff]
        %v238 = vld [vmem:[%s202 + $0x48] sm:$0xff]
        %v239 = vld [vmem:[%s202 + $0x50] sm:$0xff]
        %v240 = vld [vmem:[%s202 + $0x58] sm:$0xff]
        %v241 = vld [vmem:[%s202 + $0x60] sm:$0xff]
        %v242 = vld [vmem:[%s202 + $0x68] sm:$0xff]
        %v243 = vld [vmem:[%s202 + $0x70] sm:$0xff]
        %v244 = vld [vmem:[%s202 + $0x78] sm:$0xff]
        %s245 = smul.u32 %s26, 128
        %s246 = sshra.s32 %s245, 7
        %s247 = sand.u32 %s245, 127
        %s248 = scalar_lea.vmem %s2, %s246
        %v249 = vld [vmem:[%s248] sm:$0x1]
        %v251 = vlaneseq
        %v252 = vshrl.u32 %v251, 7
        %v253 = vsub.s32 0, %v252
        %v254 = vrot.slane %v249, %v253
        %256 = vmatprep.subr.mxu0 0.0
        %257 = vmatpush1.msra.mxu0 %v244
        %258 = vmatprep.subr.mxu0 0.0
        %259 = vmatpush1.msra.mxu0 %v243
        %260 = vmatprep.subr.mxu0 0.0
        %261 = vmatpush1.msra.mxu0 %v242
        %262 = vmatprep.subr.mxu0 0.0
        %263 = vmatpush1.msra.mxu0 %v241
        %264 = vmatprep.subr.mxu0 0.0
        %265 = vmatpush1.msra.mxu0 %v240
        %266 = vmatprep.subr.mxu0 0.0
        %267 = vmatpush1.msra.mxu0 %v239
        %268 = vmatprep.subr.mxu0 0.0
        %269 = vmatpush1.msra.mxu0 %v238
        %270 = vmatprep.subr.mxu0 0.0
        %271 = vmatpush1.msra.mxu0 %v237
        %272 = vmatprep.subr.mxu0 0.0
        %273 = vmatpush1.msra.mxu0 %v236
        %274 = vmatprep.subr.mxu0 0.0
        %275 = vmatpush1.msra.mxu0 %v235
        %276 = vmatprep.subr.mxu0 0.0
        %277 = vmatpush1.msra.mxu0 %v234
        %278 = vmatprep.subr.mxu0 0.0
        %279 = vmatpush1.msra.mxu0 %v233
        %280 = vmatprep.subr.mxu0 0.0
        %281 = vmatpush1.msra.mxu0 %v232
        %282 = vmatprep.subr.mxu0 0.0
        %283 = vmatpush1.msra.mxu0 %v231
        %284 = vmatprep.subr.mxu0 0.0
        %285 = vmatpush1.msra.mxu0 %v230
        %286 = vmatprep.subr.mxu0 0.0
        %287 = vmatpush1.msra.mxu0 %v229
        %288 = vmatprep.subr.mxu0 0.0
        %289 = vmatpush2.msra.mxu0 0.0
        %290 = vmatprep.subr.mxu0 0.0
        %291 = vmatpush2.msra.mxu0 0.0
        %292 = vmatprep.subr.mxu0 0.0
        %293 = vmatpush2.msra.mxu0 0.0
        %294 = vmatprep.subr.mxu0 0.0
        %295 = vmatpush2.msra.mxu0 0.0
        %296 = vmatprep.subr.mxu0 0.0
        %297 = vmatpush2.msra.mxu0 0.0
        %298 = vmatprep.subr.mxu0 0.0
        %299 = vmatpush2.msra.mxu0 0.0
        %300 = vmatprep.subr.mxu0 0.0
        %301 = vmatpush2.msra.mxu0 0.0
        %302 = vmatprep.subr.mxu0 0.0
        %303 = vmatpush2.msra.mxu0 0.0
        %304 = vmatprep.subr.mxu0 0.0
        %305 = vmatpush2.msra.mxu0 0.0
        %306 = vmatprep.subr.mxu0 0.0
        %307 = vmatpush2.msra.mxu0 0.0
        %308 = vmatprep.subr.mxu0 0.0
        %309 = vmatpush2.msra.mxu0 0.0
        %310 = vmatprep.subr.mxu0 0.0
        %311 = vmatpush2.msra.mxu0 0.0
        %312 = vmatprep.subr.mxu0 0.0
        %313 = vmatpush2.msra.mxu0 0.0
        %314 = vmatprep.subr.mxu0 0.0
        %315 = vmatpush2.msra.mxu0 0.0
        %316 = vmatprep.subr.mxu0 0.0
        %317 = vmatpush2.msra.mxu0 0.0
        %318 = vmatprep.subr.mxu0 0.0
        %319 = vmatpush2.msra.mxu0 0.0
        %320 = vmatprep.mubr.f32.mxu0 0.0
        %321 = vmatmul.mubr.f32.gmra.mxu0 %v227
        %v322 = vpop.f32.mrf.mxu0
        %v323 = vadd.f32 %v254, %v322
        %v324 = vpop.f32.mrf.mxu0
        %325 = vmatprep.mubr.f32.mxu0 0.0
        %326 = vmatmul.mubr.f32.gmra.mxu0 %v228
        %v327 = vpop.f32.mrf.mxu0
        %v328 = vadd.f32 %v254, %v327
        %v329 = vpop.f32.mrf.mxu0
        %330 = vdwg.mxu0
        %331 = vst [vmem:[%s224] sm:$0xff] %v323
        %332 = vst [vmem:[%s224 + $0x8] sm:$0xff] %v328
        %s333 = sand.u32 %s116, 1
        %s334 = scalar_lea.sflag [#allocation4], %s333
        %s335 = sand.u32 %s116, 1
        %s336 = smul.addr %s335, 16
        %s337 = scalar_lea.vmem [#allocation7], %s336
        // Predicated region
        $region41: #{_projector_matmul.1} parent=31 // pred_check
          %p338 = pneg %p126
        $region42: #{_projector_matmul.1} parent=31 // pred_check_branch
          %340 = sbr.rel (%p338) target = $region44
        $region43: #{_projector_matmul.1} parent=31 // pred_region
          %s341 = smul.u32 2, %s25
          %s343 = ssub.s32 256, 256
          %344 = vsyncadd %s334, %s343
          %s345 = smul.addr %s341, 2
          %s346 = sadd.s32 %s26, %s345
          %s347 = smul.addr %s346, 128
          %s348 = scalar_lea.hbm %s3, %s347
          %s349 = sshll.u32 %s337, 4
          %s350 = int_to_ptr.vmem [resolvable:$true] %s349
          %355 = dma.vmem_to_hbm [thread:$0]  %s350, 256, %s348, %s334, 128, 256, 8
        $region44: #{_projector_matmul.1} parent=31 // pred_fallthru
          _
      $region32: #{_projector_matmul.1} parent=5 // pred_fallthru
        _
      %p356 = scmp.le.s32.totalorder 2, %s16
      // Predicated region
      $region45: #{_projector_matmul.1} parent=5 // pred_check
        %p357 = pneg %p356
      $region46: #{_projector_matmul.1} parent=5 // pred_check_branch
        %359 = sbr.rel (%p357) target = $region48
      $region47: #{_projector_matmul.1} parent=5 // pred_region
        %s360 = ssub.s32 %s16, 2
        // Predicated region
        $region49: #{_projector_matmul.1} parent=47 // pred_check
          %p361 = pneg %p132
        $region50: #{_projector_matmul.1} parent=47 // pred_check_branch
          %363 = sbr.rel (%p361) target = $region52
        $region51: #{_projector_matmul.1} parent=47 // pred_region
          %s364 = sand.u32 %s117, 1
          %s365 = scalar_lea.sflag [#allocation4], %s364
          %s366 = sand.u32 %s117, 1
          %s367 = smul.addr %s366, 16
          %s368 = scalar_lea.vmem [#allocation7], %s367
          %369 = dma.done %s365, 256
        $region52: #{_projector_matmul.1} parent=47 // pred_fallthru
          _
      $region48: #{_projector_matmul.1} parent=5 // pred_fallthru
        _
    $region6: #{_projector_matmul.1} parent=1 // loop_footer
      %s20 = sadd.s32 1, %s16
    $region7: #{_projector_matmul.1} parent=1 // loop_footer_branch
      %15 = sbr.rel target = $region3
    $region8: #{_projector_matmul.1} parent=1 // loop_exit
      _
    %370 = vsyncpa [#allocation3], 1
    %s371 = scalar_lea.sflag [#allocation3], 1
    %372 = vsyncpa %s371, 1
    %373 = vsyncpa [#allocation6], 1
    %s374 = scalar_lea.sflag [#allocation6], 1
    %375 = vsyncpa %s374, 1
    %376 = vsyncpa [#allocation4], 1
    %s377 = scalar_lea.sflag [#allocation4], 1
    %378 = vsyncpa %s377, 1

</llo_original>
